<compile_context>
chip_gen: v7x
topology: tpu7x:2x2x1
jax: 0.10.0
libtpu: 0.0.40
codegen_flags: <defaults>
</compile_context>

<pallas_src>
import functools

import jax
import jax.numpy as jnp
from jax.experimental import pallas as pl
from jax.experimental.pallas import tpu as pltpu


def _round_up(x, m):
    return (x + m - 1) // m * m


def _mlp_head_kernel(x_ref, w1_ref, b1_ref, w2_ref, b2_ref, o_ref):
    # Hoist bias reads once per grid step.
    b1 = b1_ref[...]
    b2 = b2_ref[...]
    # x arrives f32 from HBM; cast to bf16 for the MXU (no extra HBM pass upstream).
    x = x_ref[...].astype(w1_ref.dtype)
    # h = tanh(x @ W1 + b1): bf16 MXU matmul, f32 accumulation, tanh on EUP.
    h = jnp.tanh(jnp.dot(x, w1_ref[...], preferred_element_type=jnp.float32) + b1)
    # out = h @ W2 + b2 (h cast back to bf16 for the MXU, accumulate in f32).
    o_ref[...] = (
        jnp.dot(h.astype(w2_ref.dtype), w2_ref[...],
                preferred_element_type=jnp.float32) + b2
    ).astype(o_ref.dtype)


def prepare_params(w1, b1, w2, b2):
    """One-time weight preparation (call at model-load time, NOT per forward call).

    Pads feature dims to multiples of 128 (lane-dense MXU tiles, unmasked output
    stores) and casts weights to bf16 (halves weight HBM traffic / VMEM footprint).
    Zero padding is exact: padded hidden columns give tanh(0 + 0) = 0 and meet zero
    W2 rows; padded output columns are sliced off in the wrapper.
    Weights are stored (in_features, out_features)."""
    D, H = w1.shape
    H2, O = w2.shape
    assert H == H2
    D_pad = _round_up(D, 128)
    H_pad = _round_up(H, 128)
    O_pad = _round_up(O, 128)

    f32, bf16 = jnp.float32, jnp.bfloat16
    w1p = jnp.zeros((D_pad, H_pad), bf16).at[:D, :H].set(jnp.asarray(w1, bf16))
    b1p = jnp.zeros((1, H_pad), f32).at[:, :H].set(jnp.asarray(b1, f32).reshape(1, -1))
    w2p = jnp.zeros((H_pad, O_pad), bf16).at[:H, :O].set(jnp.asarray(w2, bf16))
    b2p = jnp.zeros((1, O_pad), f32).at[:, :O].set(jnp.asarray(b2, f32).reshape(1, -1))
    return {"w1": w1p, "b1": b1p, "w2": w2p, "b2": b2p}


def cnn_head_pallas(x, params, *, T, block_b=None, out_dtype=jnp.float32):
    """Fused fc1 -> tanh -> fc_last, then reshape(-1, T, 7).

    `params` must come from `prepare_params` (pre-padded, bf16 weights)."""
    B, D = x.shape
    w1p, b1p, w2p, b2p = params["w1"], params["b1"], params["w2"], params["b2"]
    D_pad, H_pad = w1p.shape
    H_pad2, O_pad = w2p.shape
    O = T * 7
    assert H_pad == H_pad2 and O_pad == _round_up(O, 128)
    # fc1 input is 256 -> already lane-aligned; no x padding copy needed.
    assert D == D_pad and D % 128 == 0, "feature dim must be 128-aligned (it is 256 here)"

    # Batch tile: whole batch in one step up to 512 rows (amortizes per-step overhead,
    # keeps the resident weights read once); for B > 512 use 256-row tiles so the
    # parallel axis has >=2 steps (both v7x TensorCores busy) while staying MXU-friendly.
    if block_b is None:
        if B <= 512:
            block_b = min(512, _round_up(B, 32))
        else:
            block_b = 256

    grid = (pl.cdiv(B, block_b),)

    flops = 2 * B * (D_pad * H_pad + H_pad * O_pad)
    bytes_accessed = (
        B * D * 4                                   # f32 activations in
        + w1p.size * 2 + w2p.size * 2               # bf16 weights
        + b1p.size * 4 + b2p.size * 4               # f32 biases
        + B * O_pad * jnp.dtype(out_dtype).itemsize  # output
    )

    # Constant-index weight/bias blocks: single-buffered (index never changes, so
    # double buffering only wastes VMEM — ~3.5 MiB saved for W2 alone at T=250).
    w_mode = pl.Buffered(1)

    out = pl.pallas_call(
        _mlp_head_kernel,
        out_shape=jax.ShapeDtypeStruct((B, O_pad), out_dtype),
        grid=grid,
        in_specs=[
            pl.BlockSpec((block_b, D_pad), lambda i: (i, 0)),                        # x tile
            pl.BlockSpec((D_pad, H_pad), lambda i: (0, 0), pipeline_mode=w_mode),    # W1
            pl.BlockSpec((1, H_pad), lambda i: (0, 0), pipeline_mode=w_mode),        # b1
            pl.BlockSpec((H_pad, O_pad), lambda i: (0, 0), pipeline_mode=w_mode),    # W2
            pl.BlockSpec((1, O_pad), lambda i: (0, 0), pipeline_mode=w_mode),        # b2
        ],
        out_specs=pl.BlockSpec((block_b, O_pad), lambda i: (i, 0)),
        compiler_params=pltpu.CompilerParams(
            dimension_semantics=("parallel",),
            vmem_limit_bytes=32 * 1024 * 1024,
        ),
        cost_estimate=pl.CostEstimate(
            flops=flops,
            transcendentals=B * H_pad,
            bytes_accessed=bytes_accessed,
        ),
    )(x, w1p, b1p, w2p, b2p)

    # Strip lane padding, then reshape like the PyTorch module.
    return out[:, :O].reshape(-1, T, 7)


def init_params(key, T):
    """Mirror the PyTorch init: orthogonal weights, zero biases.
    fc1: 256 -> T*7//2, fc_last: T*7//2 -> T*7.  Weights stored (in, out)."""
    out_dim = T * 7
    hid = out_dim // 2
    k1, k2 = jax.random.split(key)
    ortho = jax.nn.initializers.orthogonal()
    w1 = ortho(k1, (256, hid), jnp.float32)
    b1 = jnp.zeros((1, hid), jnp.float32)
    w2 = ortho(k2, (hid, out_dim), jnp.float32)
    b2 = jnp.zeros((1, out_dim), jnp.float32)
    return w1, b1, w2, b2


def reference_f32(x, w1, b1, w2, b2, T):
    h = jnp.tanh(x @ w1 + b1)
    return (h @ w2 + b2).reshape(-1, T, 7)


def reference_bf16(x, w1, b1, w2, b2, T):
    """Reference that mimics the kernel's precision (bf16 operands, f32 accumulation)."""
    xb, w1b, w2b = (a.astype(jnp.bfloat16) for a in (x, w1, w2))
    h = jnp.tanh(jnp.dot(xb, w1b, preferred_element_type=jnp.float32) + b1)
    out = jnp.dot(h.astype(jnp.bfloat16), w2b, preferred_element_type=jnp.float32) + b2
    return out.reshape(-1, T, 7)


if __name__ == "__main__":
    T = 8        # small T for the demo (module default is 250)
    B = 8        # batch
    FEAT = 256   # feature dim fixed by fc1 = Linear(256, ...)

    key = jax.random.PRNGKey(0)
    kx, kp = jax.random.split(key)

    # x stands in for pt.forward_traj(input): a (B, 256) feature tensor.
    x = jax.random.normal(kx, (B, FEAT), jnp.float32)
    w1, b1, w2, b2 = init_params(kp, T)

    # One-time weight preparation (pad + bf16 cast), hoisted out of the call path.
    params = jax.block_until_ready(prepare_params(w1, b1, w2, b2))

    fn = jax.jit(functools.partial(cnn_head_pallas, T=T))
    out = jax.block_until_ready(fn(x, params))

    assert out.shape == (B, T, 7), out.shape

    # Tight check against a reference at the kernel's own (bf16-in / f32-acc) precision.
    ref_bf16 = reference_bf16(x, w1, b1, w2, b2, T)
    assert jnp.allclose(out, ref_bf16, atol=1e-2, rtol=1e-2), "mismatch vs bf16 reference"

    # Loose sanity check against the pure-f32 PyTorch-equivalent math.
    ref_f32 = reference_f32(x, w1, b1, w2, b2, T)
    assert jnp.allclose(out, ref_f32, atol=1.5e-1, rtol=1.5e-1), "mismatch vs f32 reference"

    print("KERNEL_OK")
</pallas_src>

<mosaic_0001>
module attributes {stable_mosaic.version = 11 : i64} {
  func.func @_mlp_head_kernel(%arg0: i32, %arg1: memref<32x256xf32, #tpu.memory_space<vmem>>, %arg2: memref<256x128xbf16, #tpu.memory_space<vmem>>, %arg3: memref<1x128xf32, #tpu.memory_space<vmem>>, %arg4: memref<128x128xbf16, #tpu.memory_space<vmem>>, %arg5: memref<1x128xf32, #tpu.memory_space<vmem>>, %arg6: memref<32x128xf32, #tpu.memory_space<vmem>>) attributes {dimension_semantics = [#tpu.dimension_semantics<parallel>], iteration_bounds = array<i64: 1>, scalar_prefetch = 0 : i64, scratch_operands = 0 : i64, tpu.core_type = #tpu.core_type<tc>, window_params = [{transform_indices = @transform_0, window_bounds = array<i64: 32, 256>}, {pipeline_mode = #tpu.pipeline_mode<synchronous>, transform_indices = @transform_1, window_bounds = array<i64: 256, 128>}, {pipeline_mode = #tpu.pipeline_mode<synchronous>, transform_indices = @transform_2, window_bounds = array<i64: 1, 128>}, {pipeline_mode = #tpu.pipeline_mode<synchronous>, transform_indices = @transform_3, window_bounds = array<i64: 128, 128>}, {pipeline_mode = #tpu.pipeline_mode<synchronous>, transform_indices = @transform_4, window_bounds = array<i64: 1, 128>}, {transform_indices = @transform_5, window_bounds = array<i64: 32, 128>}]} {
    %c0 = arith.constant 0 : index
    %c0_0 = arith.constant 0 : index
    %0 = vector.load %arg3[%c0, %c0_0] : memref<1x128xf32, #tpu.memory_space<vmem>>, vector<1x128xf32>
    %c0_1 = arith.constant 0 : index
    %c0_2 = arith.constant 0 : index
    %1 = vector.load %arg5[%c0_1, %c0_2] : memref<1x128xf32, #tpu.memory_space<vmem>>, vector<1x128xf32>
    %c0_3 = arith.constant 0 : index
    %c0_4 = arith.constant 0 : index
    %2 = vector.load %arg1[%c0_3, %c0_4] : memref<32x256xf32, #tpu.memory_space<vmem>>, vector<32x256xf32>
    %3 = arith.truncf %2 : vector<32x256xf32> to vector<32x256xbf16>
    %c0_5 = arith.constant 0 : index
    %c0_6 = arith.constant 0 : index
    %4 = vector.load %arg2[%c0_5, %c0_6] : memref<256x128xbf16, #tpu.memory_space<vmem>>, vector<256x128xbf16>
    %cst = arith.constant dense<0.000000e+00> : vector<32x128xf32>
    %5 = tpu.matmul %3, %4, %cst {dimension_numbers = #tpu.dot_dimension_numbers<[1], [0], [0], [1], [0, 0, 1, 1], [], []>} : vector<32x256xbf16>, vector<256x128xbf16>, vector<32x128xf32> -> vector<32x128xf32>
    %6 = vector.broadcast %0 : vector<1x128xf32> to vector<32x128xf32>
    %7 = arith.addf %5, %6 : vector<32x128xf32>
    %8 = math.tanh %7 : vector<32x128xf32>
    %9 = arith.truncf %8 : vector<32x128xf32> to vector<32x128xbf16>
    %c0_7 = arith.constant 0 : index
    %c0_8 = arith.constant 0 : index
    %10 = vector.load %arg4[%c0_7, %c0_8] : memref<128x128xbf16, #tpu.memory_space<vmem>>, vector<128x128xbf16>
    %cst_9 = arith.constant dense<0.000000e+00> : vector<32x128xf32>
    %11 = tpu.matmul %9, %10, %cst_9 {dimension_numbers = #tpu.dot_dimension_numbers<[1], [0], [0], [1], [0, 0, 1, 1], [], []>} : vector<32x128xbf16>, vector<128x128xbf16>, vector<32x128xf32> -> vector<32x128xf32>
    %12 = vector.broadcast %1 : vector<1x128xf32> to vector<32x128xf32>
    %13 = arith.addf %11, %12 : vector<32x128xf32>
    %c0_10 = arith.constant 0 : index
    %c0_11 = arith.constant 0 : index
    %14 = vector.load %arg6[%c0_10, %c0_11] : memref<32x128xf32, #tpu.memory_space<vmem>>, vector<32x128xf32>
    tpu.vector_store %arg6[%c0_10, %c0_11], %13 {strides = array<i32>} : memref<32x128xf32, #tpu.memory_space<vmem>>, vector<32x128xf32>,
    return
  }
  func.func @transform_0(%arg0: i32) -> (i32, i32) {
    %c0_i32 = arith.constant 0 : i32
    %c0_i32_0 = arith.constant 0 : i32
    return %arg0, %c0_i32 : i32, i32
  }
  func.func @transform_1(%arg0: i32) -> (i32, i32) {
    %c0_i32 = arith.constant 0 : i32
    %c0_i32_0 = arith.constant 0 : i32
    %c0_i32_1 = arith.constant 0 : i32
    return %c0_i32, %c0_i32_0 : i32, i32
  }
  func.func @transform_2(%arg0: i32) -> (i32, i32) {
    %c0_i32 = arith.constant 0 : i32
    %c0_i32_0 = arith.constant 0 : i32
    %c0_i32_1 = arith.constant 0 : i32
    return %c0_i32, %c0_i32_0 : i32, i32
  }
  func.func @transform_3(%arg0: i32) -> (i32, i32) {
    %c0_i32 = arith.constant 0 : i32
    %c0_i32_0 = arith.constant 0 : i32
    %c0_i32_1 = arith.constant 0 : i32
    return %c0_i32, %c0_i32_0 : i32, i32
  }
  func.func @transform_4(%arg0: i32) -> (i32, i32) {
    %c0_i32 = arith.constant 0 : i32
    %c0_i32_0 = arith.constant 0 : i32
    %c0_i32_1 = arith.constant 0 : i32
    return %c0_i32, %c0_i32_0 : i32, i32
  }
  func.func @transform_5(%arg0: i32) -> (i32, i32) {
    %c0_i32 = arith.constant 0 : i32
    %c0_i32_0 = arith.constant 0 : i32
    return %arg0, %c0_i32 : i32, i32
  }
}

</mosaic_0001>

<llo_original>
// kernel: cnn_head_pallas.1
$region0: #{cnn_head_pallas.1}
  #allocation0 [shape = 'u32[]', space=smem, size = 0x4, offset = 0x4, fixed_abs, tag = 'smem constant byte address 0x4 - core index']
  #allocation1 [shape = 'u32[144,128]{1,0:T(1,128)}', space=vmem, size = 0x12000, scoped, tag = 'internal scratch']
  %s0 = inlined_call_operand.hbm [shape: f32[8,256], index: 0, kind: input, shape index: {}]
  %s1 = inlined_call_operand.hbm [shape: bf16[256,128], index: 1, kind: input, shape index: {}]
  %s2 = inlined_call_operand.vmem [shape: f32[1,128], index: 2, kind: input, shape index: {}]
  %s3 = inlined_call_operand.hbm [shape: bf16[128,128], index: 3, kind: input, shape index: {}]
  %s4 = inlined_call_operand.vmem [shape: f32[1,128], index: 4, kind: input, shape index: {}]
  %s5 = inlined_call_operand.vmem [shape: f32[8,128], index: 5, kind: output, shape index: {}]
  %s6 = sld [smem:[#allocation0]]
  $region76: #{cnn_head_pallas.1} parent=0
    _
  %s8 = ssub.s32 1, %s6
  %s9 = scalar_select 0, %s8, %s6
  $region1: #{cnn_head_pallas.1} parent=0
    #allocation2 [shape = 'u8[32768]{0}', space=vmem, size = 0x8000, scoped, tag = 'input window, operand 0, single buffered']
    #allocation3 [shape = 's32[1]{0}', space=sflag, size = 0x4, scoped, tag = 'scoped memory for cnn_head_pallas.1']
    #allocation4 [shape = 'u8[65536]{0}', space=vmem, size = 0x10000, scoped, tag = 'input window, operand 1, single buffered']
    #allocation5 [shape = 's32[1]{0}', space=sflag, size = 0x4, scoped, tag = 'scoped memory for cnn_head_pallas.1']
    #allocation6 [shape = 'u8[32768]{0}', space=vmem, size = 0x8000, scoped, tag = 'input window, operand 3, single buffered']
    #allocation7 [shape = 'u8[16384]{0}', space=vmem, size = 0x4000, scoped, tag = 'output window, operand 0, single buffered']
    %10 = vsyncpa [#allocation3], 0
    %11 = vsyncpa [#allocation5], 0
    // Predicated region
    $region2: #{cnn_head_pallas.1} parent=1 // pred_check
      _
    $region3: #{cnn_head_pallas.1} parent=1 // pred_check_branch
      %13 = sbr.rel (0) target = $region5
    $region4: #{cnn_head_pallas.1} parent=1 // pred_region
      %s15 = ssub.s32 1024, 256
      %16 = vsyncadd [#allocation3], %s15
      %s17 = sshll.u32 [#allocation2], 4
      %s18 = int_to_ptr.vmem [resolvable:$true] %s17
      %23 = dma.hbm_to_vmem [thread:$0]  %s0, 256, %s18, [#allocation3], 256, 256, 16
    $region5: #{cnn_head_pallas.1} parent=1 // pred_fallthru
      _
    // Predicated region
    $region6: #{cnn_head_pallas.1} parent=1 // pred_check
      _
    $region7: #{cnn_head_pallas.1} parent=1 // pred_check_branch
      %25 = sbr.rel (0) target = $region9
    $region8: #{cnn_head_pallas.1} parent=1 // pred_region
      %s27 = ssub.s32 2048, 2048
      %28 = vsyncadd [#allocation5], %s27
      %s29 = sshll.u32 [#allocation4], 4
      %s30 = int_to_ptr.vmem [resolvable:$true] %s29
      %35 = dma.hbm_to_vmem [thread:$0]  %s1, 2048, %s30, [#allocation5], 64, 64, 4
    $region9: #{cnn_head_pallas.1} parent=1 // pred_fallthru
      _
    // Predicated region
    $region10: #{cnn_head_pallas.1} parent=1 // pred_check
      _
    $region11: #{cnn_head_pallas.1} parent=1 // pred_check_branch
      %37 = sbr.rel (0) target = $region13
    $region12: #{cnn_head_pallas.1} parent=1 // pred_region
      _
    $region13: #{cnn_head_pallas.1} parent=1 // pred_fallthru
      _
    // Predicated region
    $region14: #{cnn_head_pallas.1} parent=1 // pred_check
      _
    $region15: #{cnn_head_pallas.1} parent=1 // pred_check_branch
      %39 = sbr.rel (0) target = $region17
    $region16: #{cnn_head_pallas.1} parent=1 // pred_region
      %s41 = ssub.s32 1024, 1024
      %42 = vsyncadd [#allocation5], %s41
      %s43 = sshll.u32 [#allocation6], 4
      %s44 = int_to_ptr.vmem [resolvable:$true] %s43
      %49 = dma.hbm_to_vmem [thread:$0]  %s3, 1024, %s44, [#allocation5], 64, 64, 4
    $region17: #{cnn_head_pallas.1} parent=1 // pred_fallthru
      _
    // Predicated region
    $region18: #{cnn_head_pallas.1} parent=1 // pred_check
      _
    $region19: #{cnn_head_pallas.1} parent=1 // pred_check_branch
      %51 = sbr.rel (0) target = $region21
    $region20: #{cnn_head_pallas.1} parent=1 // pred_region
      _
    $region21: #{cnn_head_pallas.1} parent=1 // pred_fallthru
      _
    // Predicated region
    $region22: #{cnn_head_pallas.1} parent=1 // pred_check
      _
    $region23: #{cnn_head_pallas.1} parent=1 // pred_check_branch
      %53 = sbr.rel (0) target = $region25
    $region24: #{cnn_head_pallas.1} parent=1 // pred_region
      %54 = dma.done [#allocation3], 1024
    $region25: #{cnn_head_pallas.1} parent=1 // pred_fallthru
      _
    // Predicated region
    $region26: #{cnn_head_pallas.1} parent=1 // pred_check
      _
    $region27: #{cnn_head_pallas.1} parent=1 // pred_check_branch
      %56 = sbr.rel (0) target = $region29
    $region28: #{cnn_head_pallas.1} parent=1 // pred_region
      %57 = dma.done [#allocation5], 2048
    $region29: #{cnn_head_pallas.1} parent=1 // pred_fallthru
      _
    // Predicated region
    $region30: #{cnn_head_pallas.1} parent=1 // pred_check
      _
    $region31: #{cnn_head_pallas.1} parent=1 // pred_check_branch
      %59 = sbr.rel (0) target = $region33
    $region32: #{cnn_head_pallas.1} parent=1 // pred_region
      %60 = dma.done [#allocation5], 1024
    $region33: #{cnn_head_pallas.1} parent=1 // pred_fallthru
      _
    %v62 = vld [vmem:[%s2] sm:$0x1]
    %v63 = vld [vmem:[%s4] sm:$0x1]
    %v64 = vld [vmem:[#allocation2] sm:$0xff]
    %v65 = vld [vmem:[#allocation2 + $0x8] sm:$0xff]
    %v66 = vld [vmem:[#allocation2 + $0x10] sm:$0xff]
    %v67 = vld [vmem:[#allocation2 + $0x18] sm:$0xff]
    %v68 = vld [vmem:[#allocation2 + $0x20] sm:$0xff]
    %v69 = vld [vmem:[#allocation2 + $0x28] sm:$0xff]
    %v70 = vld [vmem:[#allocation2 + $0x30] sm:$0xff]
    %v71 = vld [vmem:[#allocation2 + $0x38] sm:$0xff]
    %v72 = vpack.c.bf16 %v66, %v64
    %v73 = vpack.c.bf16 %v67, %v65
    %v74 = vpack.c.bf16 %v70, %v68
    %v75 = vpack.c.bf16 %v71, %v69
    %v76 = vld [vmem:[#allocation4] sm:$0xf]
    %v77 = vld [vmem:[#allocation4 + $0x4] sm:$0xf]
    %v78 = vld [vmem:[#allocation4 + $0x8] sm:$0xf]
    %v79 = vld [vmem:[#allocation4 + $0xc] sm:$0xf]
    %v80 = vld [vmem:[#allocation4 + $0x10] sm:$0xf]
    %v81 = vld [vmem:[#allocation4 + $0x14] sm:$0xf]
    %v82 = vld [vmem:[#allocation4 + $0x18] sm:$0xf]
    %v83 = vld [vmem:[#allocation4 + $0x1c] sm:$0xf]
    %v84 = vld [vmem:[#allocation4 + $0x20] sm:$0xf]
    %v85 = vld [vmem:[#allocation4 + $0x24] sm:$0xf]
    %v86 = vld [vmem:[#allocation4 + $0x28] sm:$0xf]
    %v87 = vld [vmem:[#allocation4 + $0x2c] sm:$0xf]
    %v88 = vld [vmem:[#allocation4 + $0x30] sm:$0xf]
    %v89 = vld [vmem:[#allocation4 + $0x34] sm:$0xf]
    %v90 = vld [vmem:[#allocation4 + $0x38] sm:$0xf]
    %v91 = vld [vmem:[#allocation4 + $0x3c] sm:$0xf]
    %v92 = vld [vmem:[#allocation4 + $0x40] sm:$0xf]
    %v93 = vld [vmem:[#allocation4 + $0x44] sm:$0xf]
    %v94 = vld [vmem:[#allocation4 + $0x48] sm:$0xf]
    %v95 = vld [vmem:[#allocation4 + $0x4c] sm:$0xf]
    %v96 = vld [vmem:[#allocation4 + $0x50] sm:$0xf]
    %v97 = vld [vmem:[#allocation4 + $0x54] sm:$0xf]
    %v98 = vld [vmem:[#allocation4 + $0x58] sm:$0xf]
    %v99 = vld [vmem:[#allocation4 + $0x5c] sm:$0xf]
    %v100 = vld [vmem:[#allocation4 + $0x60] sm:$0xf]
    %v101 = vld [vmem:[#allocation4 + $0x64] sm:$0xf]
    %v102 = vld [vmem:[#allocation4 + $0x68] sm:$0xf]
    %v103 = vld [vmem:[#allocation4 + $0x6c] sm:$0xf]
    %v104 = vld [vmem:[#allocation4 + $0x70] sm:$0xf]
    %v105 = vld [vmem:[#allocation4 + $0x74] sm:$0xf]
    %v106 = vld [vmem:[#allocation4 + $0x78] sm:$0xf]
    %v107 = vld [vmem:[#allocation4 + $0x7c] sm:$0xf]
    %v109 = vlaneseq
    %v110 = vshrl.u32 %v109, 7
    %v111 = vsub.s32 0, %v110
    %v112 = vrot.slane %v62, %v111
    %v146 = vunpack.c.l.b16 %v76
    %v147 = vunpack.c.l.b16 %v77
    %v148 = vunpack.c.l.b16 %v78
    %v149 = vunpack.c.l.b16 %v79
    %v150 = vunpack.c.l.b16 %v80
    %v151 = vunpack.c.l.b16 %v81
    %v152 = vunpack.c.l.b16 %v82
    %v153 = vunpack.c.l.b16 %v83
    %v154 = vunpack.c.l.b16 %v84
    %v155 = vunpack.c.l.b16 %v85
    %v156 = vunpack.c.l.b16 %v86
    %v157 = vunpack.c.l.b16 %v87
    %v158 = vunpack.c.l.b16 %v88
    %v159 = vunpack.c.l.b16 %v89
    %v160 = vunpack.c.l.b16 %v90
    %v161 = vunpack.c.l.b16 %v91
    %v162 = vunpack.c.l.b16 %v92
    %v163 = vunpack.c.l.b16 %v93
    %v164 = vunpack.c.l.b16 %v94
    %v165 = vunpack.c.l.b16 %v95
    %v166 = vunpack.c.l.b16 %v96
    %v167 = vunpack.c.l.b16 %v97
    %v168 = vunpack.c.l.b16 %v98
    %v169 = vunpack.c.l.b16 %v99
    %v170 = vunpack.c.l.b16 %v100
    %v171 = vunpack.c.l.b16 %v101
    %v172 = vunpack.c.l.b16 %v102
    %v173 = vunpack.c.l.b16 %v103
    %v174 = vunpack.c.l.b16 %v104
    %v175 = vunpack.c.l.b16 %v105
    %v176 = vunpack.c.l.b16 %v106
    %v177 = vunpack.c.l.b16 %v107
    %v178 = vpack.c.b16 %v147, %v146
    %v179 = vpack.c.b16 %v149, %v148
    %v180 = vpack.c.b16 %v151, %v150
    %v181 = vpack.c.b16 %v153, %v152
    %v182 = vpack.c.b16 %v155, %v154
    %v183 = vpack.c.b16 %v157, %v156
    %v184 = vpack.c.b16 %v159, %v158
    %v185 = vpack.c.b16 %v161, %v160
    %v186 = vpack.c.b16 %v163, %v162
    %v187 = vpack.c.b16 %v165, %v164
    %v188 = vpack.c.b16 %v167, %v166
    %v189 = vpack.c.b16 %v169, %v168
    %v190 = vpack.c.b16 %v171, %v170
    %v191 = vpack.c.b16 %v173, %v172
    %v192 = vpack.c.b16 %v175, %v174
    %v193 = vpack.c.b16 %v177, %v176
    %210 = vmatprep.subr.bf16.mxu0 0
    %211 = vmatpush1.bf16.msra.mxu0 %v178
    %212 = vmatprep.subr.bf16.mxu0 0
    %213 = vmatpush1.bf16.msra.mxu0 %v179
    %214 = vmatprep.subr.bf16.mxu0 0
    %215 = vmatpush1.bf16.msra.mxu0 %v180
    %216 = vmatprep.subr.bf16.mxu0 0
    %217 = vmatpush1.bf16.msra.mxu0 %v181
    %218 = vmatprep.subr.bf16.mxu0 0
    %219 = vmatpush1.bf16.msra.mxu0 %v182
    %220 = vmatprep.subr.bf16.mxu0 0
    %221 = vmatpush1.bf16.msra.mxu0 %v183
    %222 = vmatprep.subr.bf16.mxu0 0
    %223 = vmatpush1.bf16.msra.mxu0 %v184
    %224 = vmatprep.subr.bf16.mxu0 0
    %225 = vmatpush1.bf16.msra.mxu0 %v185
    %226 = vmatprep.subr.bf16.mxu0 0
    %227 = vmatpush1.bf16.msra.mxu0 %v186
    %228 = vmatprep.subr.bf16.mxu0 0
    %229 = vmatpush1.bf16.msra.mxu0 %v187
    %230 = vmatprep.subr.bf16.mxu0 0
    %231 = vmatpush1.bf16.msra.mxu0 %v188
    %232 = vmatprep.subr.bf16.mxu0 0
    %233 = vmatpush1.bf16.msra.mxu0 %v189
    %234 = vmatprep.subr.bf16.mxu0 0
    %235 = vmatpush1.bf16.msra.mxu0 %v190
    %236 = vmatprep.subr.bf16.mxu0 0
    %237 = vmatpush1.bf16.msra.mxu0 %v191
    %238 = vmatprep.subr.bf16.mxu0 0
    %239 = vmatpush1.bf16.msra.mxu0 %v192
    %240 = vmatprep.subr.bf16.mxu0 0
    %241 = vmatpush1.bf16.msra.mxu0 %v193
    %242 = vmatprep.mubr.bf16.mxu0 %v73
    %243 = vmatmul.mubr.bf16.gmra.mrb[0].mxu0 %v72
    %v244 = vpop.f32.mrb[0].mxu0
    %v245 = vadd.f32 %v112, %v244
    %v246 = vpop.f32.mrb[0].mxu0
    %v247 = vpop.f32.mrb[0].mxu0
    %v248 = vadd.f32 %v112, %v247
    %v249 = vpop.f32.mrb[0].mxu0
    %250 = vmatprep.mubr.bf16.mxu0 %v75
    %251 = vmatmul.mubr.bf16.gmra.mrb[0].mxu0 %v74
    %v252 = vpop.f32.mrb[0].mxu0
    %v253 = vadd.f32 %v112, %v252
    %v254 = vpop.f32.mrb[0].mxu0
    %v255 = vpop.f32.mrb[0].mxu0
    %v256 = vadd.f32 %v112, %v255
    %v257 = vpop.f32.mrb[0].mxu0
    %258 = vdwg.mxu0
    %v259 = vtanh.pop %v245
    %v260 = vtanh.pop %v248
    %v261 = vtanh.pop %v253
    %v262 = vtanh.pop %v256
    %v263 = vpack.c.bf16 %v260, %v259
    %v264 = vpack.c.bf16 %v262, %v261
    %v265 = vld [vmem:[#allocation6] sm:$0xf]
    %v266 = vld [vmem:[#allocation6 + $0x4] sm:$0xf]
    %v267 = vld [vmem:[#allocation6 + $0x8] sm:$0xf]
    %v268 = vld [vmem:[#allocation6 + $0xc] sm:$0xf]
    %v269 = vld [vmem:[#allocation6 + $0x10] sm:$0xf]
    %v270 = vld [vmem:[#allocation6 + $0x14] sm:$0xf]
    %v271 = vld [vmem:[#allocation6 + $0x18] sm:$0xf]
    %v272 = vld [vmem:[#allocation6 + $0x1c] sm:$0xf]
    %v273 = vld [vmem:[#allocation6 + $0x20] sm:$0xf]
    %v274 = vld [vmem:[#allocation6 + $0x24] sm:$0xf]
    %v275 = vld [vmem:[#allocation6 + $0x28] sm:$0xf]
    %v276 = vld [vmem:[#allocation6 + $0x2c] sm:$0xf]
    %v277 = vld [vmem:[#allocation6 + $0x30] sm:$0xf]
    %v278 = vld [vmem:[#allocation6 + $0x34] sm:$0xf]
    %v279 = vld [vmem:[#allocation6 + $0x38] sm:$0xf]
    %v280 = vld [vmem:[#allocation6 + $0x3c] sm:$0xf]
    %v282 = vlaneseq
    %v283 = vshrl.u32 %v282, 7
    %v284 = vsub.s32 0, %v283
    %v285 = vrot.slane %v63, %v284
    %v303 = vunpack.c.l.b16 %v265
    %v304 = vunpack.c.l.b16 %v266
    %v305 = vunpack.c.l.b16 %v267
    %v306 = vunpack.c.l.b16 %v268
    %v307 = vunpack.c.l.b16 %v269
    %v308 = vunpack.c.l.b16 %v270
    %v309 = vunpack.c.l.b16 %v271
    %v310 = vunpack.c.l.b16 %v272
    %v311 = vunpack.c.l.b16 %v273
    %v312 = vunpack.c.l.b16 %v274
    %v313 = vunpack.c.l.b16 %v275
    %v314 = vunpack.c.l.b16 %v276
    %v315 = vunpack.c.l.b16 %v277
    %v316 = vunpack.c.l.b16 %v278
    %v317 = vunpack.c.l.b16 %v279
    %v318 = vunpack.c.l.b16 %v280
    %v319 = vpack.c.b16 %v304, %v303
    %v320 = vpack.c.b16 %v306, %v305
    %v321 = vpack.c.b16 %v308, %v307
    %v322 = vpack.c.b16 %v310, %v309
    %v323 = vpack.c.b16 %v312, %v311
    %v324 = vpack.c.b16 %v314, %v313
    %v325 = vpack.c.b16 %v316, %v315
    %v326 = vpack.c.b16 %v318, %v317
    %335 = vmatprep.subr.bf16.mxu0 0
    %336 = vmatpush1.bf16.msra.mxu0 %v319
    %337 = vmatprep.subr.bf16.mxu0 0
    %338 = vmatpush1.bf16.msra.mxu0 %v320
    %339 = vmatprep.subr.bf16.mxu0 0
    %340 = vmatpush1.bf16.msra.mxu0 %v321
    %341 = vmatprep.subr.bf16.mxu0 0
    %342 = vmatpush1.bf16.msra.mxu0 %v322
    %343 = vmatprep.subr.bf16.mxu0 0
    %344 = vmatpush1.bf16.msra.mxu0 %v323
    %345 = vmatprep.subr.bf16.mxu0 0
    %346 = vmatpush1.bf16.msra.mxu0 %v324
    %347 = vmatprep.subr.bf16.mxu0 0
    %348 = vmatpush1.bf16.msra.mxu0 %v325
    %349 = vmatprep.subr.bf16.mxu0 0
    %350 = vmatpush1.bf16.msra.mxu0 %v326
    %351 = vmatprep.subr.bf16.mxu0 0
    %352 = vmatpush1.bf16.msra.mxu0 0
    %353 = vmatprep.subr.bf16.mxu0 0
    %354 = vmatpush1.bf16.msra.mxu0 0
    %355 = vmatprep.subr.bf16.mxu0 0
    %356 = vmatpush1.bf16.msra.mxu0 0
    %357 = vmatprep.subr.bf16.mxu0 0
    %358 = vmatpush1.bf16.msra.mxu0 0
    %359 = vmatprep.subr.bf16.mxu0 0
    %360 = vmatpush1.bf16.msra.mxu0 0
    %361 = vmatprep.subr.bf16.mxu0 0
    %362 = vmatpush1.bf16.msra.mxu0 0
    %363 = vmatprep.subr.bf16.mxu0 0
    %364 = vmatpush1.bf16.msra.mxu0 0
    %365 = vmatprep.subr.bf16.mxu0 0
    %366 = vmatpush1.bf16.msra.mxu0 0
    %367 = vmatprep.mubr.bf16.mxu0 0
    %368 = vmatmul.mubr.bf16.gmra.mrb[0].mxu0 %v263
    %v369 = vpop.f32.mrb[0].mxu0
    %v370 = vadd.f32 %v285, %v369
    %v371 = vpop.f32.mrb[0].mxu0
    %v372 = vpop.f32.mrb[0].mxu0
    %v373 = vadd.f32 %v285, %v372
    %v374 = vpop.f32.mrb[0].mxu0
    %375 = vmatprep.mubr.bf16.mxu0 0
    %376 = vmatmul.mubr.bf16.gmra.mrb[0].mxu0 %v264
    %v377 = vpop.f32.mrb[0].mxu0
    %v378 = vadd.f32 %v285, %v377
    %v379 = vpop.f32.mrb[0].mxu0
    %v380 = vpop.f32.mrb[0].mxu0
    %v381 = vadd.f32 %v285, %v380
    %v382 = vpop.f32.mrb[0].mxu0
    %383 = vdwg.mxu0
    %384 = vst [vmem:[#allocation7] sm:$0xff] %v370
    %385 = vst [vmem:[#allocation7 + $0x8] sm:$0xff] %v373
    %386 = vst [vmem:[#allocation7 + $0x10] sm:$0xff] %v378
    %387 = vst [vmem:[#allocation7 + $0x18] sm:$0xff] %v381
    // Predicated region
    $region34: #{cnn_head_pallas.1} parent=1 // pred_check
      _
    $region35: #{cnn_head_pallas.1} parent=1 // pred_check_branch
      %389 = sbr.rel (0) target = $region37
    $region36: #{cnn_head_pallas.1} parent=1 // pred_region
      // Predicated region
      $region38: #{cnn_head_pallas.1} parent=36 // pred_check
        _
      $region39: #{cnn_head_pallas.1} parent=36 // pred_check_branch
        %391 = sbr.rel (0) target = $region41
      $region40: #{cnn_head_pallas.1} parent=36 // pred_region
        // Predicated region
        $region42: #{cnn_head_pallas.1} parent=40 // pred_check
          _
        $region43: #{cnn_head_pallas.1} parent=40 // pred_check_branch
          %393 = sbr.rel (0) target = $region45
        $region44: #{cnn_head_pallas.1} parent=40 // pred_region
          // Predicated region
          $region57: #{cnn_head_pallas.1} parent=44 // pred_check
            _
          $region58: #{cnn_head_pallas.1} parent=44 // pred_check_branch
            %408 = sbr.rel (0) target = $region60
          $region59: #{cnn_head_pallas.1} parent=44 // pred_region
            loop: start=0, step=1, limit=1
            $region61: #{cnn_head_pallas.1} parent=59 // loop_pre_header
              _
            $region62: #{cnn_head_pallas.1} parent=59 // loop_header
              %s410 = sphi 0, %s414
              %p411 = scmp.ge.s32.totalorder %s410, 1
              %s415 = sphi [#allocation7], [#allocation7]
              %s416 = sphi %s5, %s5
            $region63: #{cnn_head_pallas.1} parent=59 // loop_header_branch
              %413 = sbr.rel (%p411) target = $region67
            $region64: #{cnn_head_pallas.1} parent=59 // loop_body
              %v417 = vld [vmem:[%s415] sm:$0xff]
              %418 = vst [vmem:[%s416] sm:$0xff] %v417
            $region65: #{cnn_head_pallas.1} parent=59 // loop_footer
              %s414 = sadd.s32 1, %s410
            $region66: #{cnn_head_pallas.1} parent=59 // loop_footer_branch
              %409 = sbr.rel target = $region62
            $region67: #{cnn_head_pallas.1} parent=59 // loop_exit
              _
          $region60: #{cnn_head_pallas.1} parent=44 // pred_fallthru
            _
          // Predicated region
          $region68: #{cnn_head_pallas.1} parent=44 // pred_check
            _
          $region69: #{cnn_head_pallas.1} parent=44 // pred_check_branch
            %420 = sbr.rel target = $region71
          $region70: #{cnn_head_pallas.1} parent=44 // pred_region
            _
          $region71: #{cnn_head_pallas.1} parent=44 // pred_fallthru
            _
        $region45: #{cnn_head_pallas.1} parent=40 // pred_fallthru
          _
        // Predicated region
        $region46: #{cnn_head_pallas.1} parent=40 // pred_check
          _
        $region47: #{cnn_head_pallas.1} parent=40 // pred_check_branch
          %395 = sbr.rel target = $region49
        $region48: #{cnn_head_pallas.1} parent=40 // pred_region
          loop: start=0, step=1, limit=1
          $region50: #{cnn_head_pallas.1} parent=48 // loop_pre_header
            _
          $region51: #{cnn_head_pallas.1} parent=48 // loop_header
            %s398 = sphi 0, %s402
            %p399 = scmp.ge.s32.totalorder %s398, 1
            %s403 = sphi [#allocation7], [#allocation7]
            %s404 = sphi %s5, %s5
          $region52: #{cnn_head_pallas.1} parent=48 // loop_header_branch
            %401 = sbr.rel (%p399) target = $region56
          $region53: #{cnn_head_pallas.1} parent=48 // loop_body
            %v405 = vld [vmem:[%s403] sm:$0xff]
            %406 = vst [vmem:[%s404] sm:$0xff] %v405
          $region54: #{cnn_head_pallas.1} parent=48 // loop_footer
            %s402 = sadd.s32 1, %s398
          $region55: #{cnn_head_pallas.1} parent=48 // loop_footer_branch
            %397 = sbr.rel target = $region51
          $region56: #{cnn_head_pallas.1} parent=48 // loop_exit
            _
        $region49: #{cnn_head_pallas.1} parent=40 // pred_fallthru
          _
      $region41: #{cnn_head_pallas.1} parent=36 // pred_fallthru
        _
      %421 = vnop
    $region37: #{cnn_head_pallas.1} parent=1 // pred_fallthru
      _
    // Predicated region
    $region72: #{cnn_head_pallas.1} parent=1 // pred_check
      _
    $region73: #{cnn_head_pallas.1} parent=1 // pred_check_branch
      %423 = sbr.rel (0) target = $region75
    $region74: #{cnn_head_pallas.1} parent=1 // pred_region
      _
    $region75: #{cnn_head_pallas.1} parent=1 // pred_fallthru
      _
    %424 = vsyncpa [#allocation3], 1
    %425 = vsyncpa [#allocation5], 1

</llo_original>
